<compile_context>
chip_gen: v7x
topology: tpu7x:2x2x1
jax: 0.10.0
libtpu: 0.0.40
codegen_flags: <defaults>
</compile_context>

<pallas_src>
import functools

import jax
import jax.numpy as jnp
from jax.experimental import pallas as pl
from jax.experimental.pallas import tpu as pltpu


# ---------------------------------------------------------------------------
# Fused kernel: gather -> P+1 branch MLPs (block-diag weights) -> aggregation
# ---------------------------------------------------------------------------
def _rel_mot_kernel(hf_ref, g_ref, w0_ref, b0_ref, wh_ref, bh_ref,
                    wl_ref, bl_ref, agg_ref, z_ref):
    # Edge gather + dst/src concat as a selection matmul:
    #   (B, N*F) @ (N*F, P1*2F) -> per-branch edge features, branch-major lanes.
    x = jnp.dot(hf_ref[...], g_ref[...], preferred_element_type=jnp.float32)

    # First MLP layer for all branches at once (block-diagonal weights).
    a = jnp.dot(x, w0_ref[...], preferred_element_type=jnp.float32) + b0_ref[...]
    a = a * jax.nn.sigmoid(a)                                  # SiLU / swish

    # Hidden layers (static unroll; wh_ref.shape[0] is a compile-time constant).
    for l in range(wh_ref.shape[0]):
        a = jnp.dot(a, wh_ref[l], preferred_element_type=jnp.float32) + bh_ref[l]
        a = a * jax.nn.sigmoid(a)

    # Output layer -> per-branch messages, (B, P1*O).
    msg = jnp.dot(a, wl_ref[...], preferred_element_type=jnp.float32) + bl_ref[...]

    # Fused aggregation: Agg = A_signed^T (kron) I_O, so
    #   z[b, n*O+o] = sum_p A[n, p] * msg_p[b, o]   (== update_all(copy_e, sum))
    z_ref[...] = jnp.dot(msg, agg_ref[...],
                         preferred_element_type=jnp.float32).astype(z_ref.dtype)


def _rel_mot_pallas(hf, g, w0, b0, wh, bh, wl, bl, agg):
    bsz, nf = hf.shape
    p2f = g.shape[1]
    pm = w0.shape[1]
    nl = wh.shape[0]
    po = wl.shape[1]
    no = agg.shape[1]
    # Everything (weights ~200 KB at these sizes) lives in VMEM for the single
    # grid step; all blocks are full-array, so no (8,128) tiling constraints.
    return pl.pallas_call(
        _rel_mot_kernel,
        out_shape=jax.ShapeDtypeStruct((bsz, no), jnp.float32),
        grid=(1,),
        in_specs=[
            pl.BlockSpec((bsz, nf), lambda i: (0, 0)),      # h, flattened (B, N*F)
            pl.BlockSpec((nf, p2f), lambda i: (0, 0)),      # gather/concat selector
            pl.BlockSpec((p2f, pm), lambda i: (0, 0)),      # first-layer W (block-diag)
            pl.BlockSpec((1, pm), lambda i: (0, 0)),        # first-layer b
            pl.BlockSpec((nl, pm, pm), lambda i: (0, 0, 0)),# hidden Ws (block-diag)
            pl.BlockSpec((nl, 1, pm), lambda i: (0, 0, 0)), # hidden bs
            pl.BlockSpec((pm, po), lambda i: (0, 0)),       # last-layer W (block-diag)
            pl.BlockSpec((1, po), lambda i: (0, 0)),        # last-layer b
            pl.BlockSpec((po, no), lambda i: (0, 0)),       # signed-incidence (kron) I_O
        ],
        out_specs=pl.BlockSpec((bsz, no), lambda i: (0, 0)),
        compiler_params=pltpu.CompilerParams(dimension_semantics=("arbitrary",)),
    )(hf, g, w0, b0, wh, bh, wl, bl, agg)


@functools.partial(jax.jit, static_argnames=("num_nodes", "out_feats"))
def rel_mot_forward(h, g, w0, b0, wh, bh, wl, bl, agg, *, num_nodes, out_feats):
    """h: (N, B, F) node features -> (N, B, out_feats), matching the module."""
    n, bsz, f = h.shape
    hf = jnp.transpose(h, (1, 0, 2)).reshape(bsz, n * f)      # layout plumbing only
    z_flat = _rel_mot_pallas(hf, g, w0, b0, wh, bh, wl, bl, agg)   # (B, N*O)
    return jnp.transpose(z_flat.reshape(bsz, num_nodes, out_feats), (1, 0, 2))


# ---------------------------------------------------------------------------
# One-time parameter / graph packing (hoisted out of the per-call path)
# ---------------------------------------------------------------------------
def pack_params(graph, params):
    src, dst, n_pairs, num_nodes = graph
    src = [int(s) for s in src]
    dst = [int(d) for d in dst]
    (w_int, b_int), (w_fix, b_fix) = params

    p1 = n_pairs + 1                       # P interactive branches + 1 fixed branch
    in2 = w_int[0].shape[1]                # 2 * in_feats
    in_feats = in2 // 2
    m = w_int[0].shape[2]
    o = w_int[-1].shape[2]
    n_hidden = len(w_int) - 2
    assert n_hidden >= 1                   # test uses MLP_layers = 2

    def cat(wi, wf):
        return jnp.concatenate([wi, wf], 0)            # (P, ...) + (1, ...) -> (P1, ...)

    def block_diag(blocks):                            # blocks: (P1, r, c)
        _, r, c = blocks.shape
        out = jnp.zeros((p1 * r, p1 * c), jnp.float32)
        for p in range(p1):
            out = out.at[p * r:(p + 1) * r, p * c:(p + 1) * c].set(blocks[p])
        return out

    w0 = block_diag(cat(w_int[0], w_fix[0]))                           # (P1*2F, P1*M)
    b0 = cat(b_int[0], b_fix[0]).reshape(1, p1 * m)
    wh = jnp.stack([block_diag(cat(w_int[1 + l], w_fix[1 + l]))
                    for l in range(n_hidden)], 0)                      # (L, P1*M, P1*M)
    bh = jnp.stack([cat(b_int[1 + l], b_fix[1 + l]).reshape(1, p1 * m)
                    for l in range(n_hidden)], 0)                      # (L, 1, P1*M)
    wl = block_diag(cat(w_int[-1], w_fix[-1]))                         # (P1*M, P1*O)
    bl = cat(b_int[-1], b_fix[-1]).reshape(1, p1 * o)

    # Gather/concat selector: x[b, p*2F + f]     = h[dst_p, b, f]
    #                         x[b, p*2F + F + f] = h[src_p, b, f]
    branch_edges = list(range(n_pairs)) + [2 * n_pairs]    # P forward edges + fixed edge
    eye_f = jnp.eye(in_feats, dtype=jnp.float32)
    g = jnp.zeros((num_nodes * in_feats, p1 * in2), jnp.float32)
    for p, e in enumerate(branch_edges):
        d, s = dst[e], src[e]
        g = g.at[d * in_feats:(d + 1) * in_feats,
                 p * in2:p * in2 + in_feats].set(eye_f)
        g = g.at[s * in_feats:(s + 1) * in_feats,
                 p * in2 + in_feats:(p + 1) * in2].set(eye_f)

    # Signed incidence: +eff on forward-edge dst, -eff on reverse-edge dst, +fixed.
    a = jnp.zeros((num_nodes, p1), jnp.float32)
    for i in range(n_pairs):
        a = a.at[dst[i], i].add(1.0)
        a = a.at[dst[n_pairs + i], i].add(-1.0)
    a = a.at[dst[2 * n_pairs], n_pairs].add(1.0)
    agg = (a.T[:, None, :, None] * jnp.eye(o, dtype=jnp.float32)[None, :, None, :]
           ).reshape(p1 * o, num_nodes * o)                            # (P1*O, N*O)

    return dict(g=g, w0=w0, b0=b0, wh=wh, bh=bh, wl=wl, bl=bl, agg=agg,
                num_nodes=num_nodes, out_feats=o)


# ---------------------------------------------------------------------------
# Parameters (deterministic, shapes from the module __init__)
# ---------------------------------------------------------------------------
def xavier_normal(key, shape):
    fan_in, fan_out = shape[-2], shape[-1]
    std = (2.0 / (fan_in + fan_out)) ** 0.5
    return std * jax.random.normal(key, shape, dtype=jnp.float32)


def init_params(key, n_pairs, in_feats, out_feats, mlp_feats, mlp_layers):
    def branch(bkey, lead):
        shapes_w = ([(lead, in_feats * 2, mlp_feats)]
                    + [(lead, mlp_feats, mlp_feats)] * mlp_layers
                    + [(lead, mlp_feats, out_feats)])
        shapes_b = ([(lead, 1, mlp_feats)]
                    + [(lead, 1, mlp_feats)] * mlp_layers
                    + [(lead, 1, out_feats)])
        keys = jax.random.split(bkey, 2 * len(shapes_w))
        ws = [xavier_normal(keys[i], s) for i, s in enumerate(shapes_w)]
        # torch __init__ leaves biases at zero; small deterministic values here so
        # the bias path is actually exercised.
        bs = [0.01 * jax.random.normal(keys[len(shapes_w) + i], s, dtype=jnp.float32)
              for i, s in enumerate(shapes_b)]
        return ws, bs

    k_int, k_fix = jax.random.split(key)
    return branch(k_int, n_pairs), branch(k_fix, 1)


# ---------------------------------------------------------------------------
# Pure-JAX reference (mirrors the PyTorch/DGL forward) for validation
# ---------------------------------------------------------------------------
def reference_forward(h, graph, params):
    src, dst, n_pairs, num_nodes = graph
    e = jnp.concatenate([h[dst], h[src]], axis=-1)
    (w_int, b_int), (w_fix, b_fix) = params
    eff = e[:n_pairs]
    fix = e[-1:]
    for w, b in zip(w_int[:-1], b_int[:-1]):
        eff = jax.nn.silu(eff @ w + b)
    eff = eff @ w_int[-1] + b_int[-1]
    for w, b in zip(w_fix[:-1], b_fix[:-1]):
        fix = jax.nn.silu(fix @ w + b)
    fix = fix @ w_fix[-1] + b_fix[-1]
    msgs = jnp.concatenate([eff, -eff, fix], 0)
    return jax.ops.segment_sum(msgs, dst, num_segments=num_nodes)


if __name__ == "__main__":
    num_nodes = 5
    in_feats, out_feats, mlp_feats, mlp_layers = 4, 4, 32, 2
    batch = 16

    # 5-DOF chain graph: bidirectional neighbor edges + one fixed (ground) edge.
    src_fwd = jnp.array([0, 1, 2, 3], dtype=jnp.int32)
    dst_fwd = jnp.array([1, 2, 3, 4], dtype=jnp.int32)
    src = jnp.concatenate([src_fwd, dst_fwd, jnp.array([0], dtype=jnp.int32)])
    dst = jnp.concatenate([dst_fwd, src_fwd, jnp.array([0], dtype=jnp.int32)])
    n_pairs = int(src.shape[0]) // 2                     # = 4 (E = 9)
    graph = (src, dst, n_pairs, num_nodes)

    key = jax.random.PRNGKey(0)
    kh, kp = jax.random.split(key)
    h = jax.random.normal(kh, (num_nodes, batch, in_feats), dtype=jnp.float32)
    params = init_params(kp, n_pairs, in_feats, out_feats, mlp_feats, mlp_layers)

    # One-time packing (block-diag weights, gather selector, signed incidence).
    packed = pack_params(graph, params)

    z = rel_mot_forward(h, packed["g"], packed["w0"], packed["b0"],
                        packed["wh"], packed["bh"], packed["wl"], packed["bl"],
                        packed["agg"], num_nodes=packed["num_nodes"],
                        out_feats=packed["out_feats"])
    z = jax.block_until_ready(z)

    z_ref = reference_forward(h, graph, params)
    assert z.shape == (num_nodes, batch, out_feats)
    assert jnp.allclose(z, z_ref, atol=1e-4, rtol=1e-4)
    print("KERNEL_OK")
</pallas_src>

<mosaic_0001>
module attributes {stable_mosaic.version = 11 : i64} {
  func.func @_rel_mot_kernel(%arg0: i32, %arg1: memref<16x20xf32, #tpu.memory_space<vmem>>, %arg2: memref<20x40xf32, #tpu.memory_space<vmem>>, %arg3: memref<40x160xf32, #tpu.memory_space<vmem>>, %arg4: memref<1x160xf32, #tpu.memory_space<vmem>>, %arg5: memref<2x160x160xf32, #tpu.memory_space<vmem>>, %arg6: memref<2x1x160xf32, #tpu.memory_space<vmem>>, %arg7: memref<160x20xf32, #tpu.memory_space<vmem>>, %arg8: memref<1x20xf32, #tpu.memory_space<vmem>>, %arg9: memref<20x20xf32, #tpu.memory_space<vmem>>, %arg10: memref<16x20xf32, #tpu.memory_space<vmem>>) attributes {dimension_semantics = [#tpu.dimension_semantics<arbitrary>], iteration_bounds = array<i64: 1>, scalar_prefetch = 0 : i64, scratch_operands = 0 : i64, tpu.core_type = #tpu.core_type<tc>, window_params = [{pipeline_mode = #tpu.pipeline_mode<synchronous>, transform_indices = @transform_0, window_bounds = array<i64: 16, 20>}, {pipeline_mode = #tpu.pipeline_mode<synchronous>, transform_indices = @transform_1, window_bounds = array<i64: 20, 40>}, {pipeline_mode = #tpu.pipeline_mode<synchronous>, transform_indices = @transform_2, window_bounds = array<i64: 40, 160>}, {pipeline_mode = #tpu.pipeline_mode<synchronous>, transform_indices = @transform_3, window_bounds = array<i64: 1, 160>}, {pipeline_mode = #tpu.pipeline_mode<synchronous>, transform_indices = @transform_4, window_bounds = array<i64: 2, 160, 160>}, {pipeline_mode = #tpu.pipeline_mode<synchronous>, transform_indices = @transform_5, window_bounds = array<i64: 2, 1, 160>}, {pipeline_mode = #tpu.pipeline_mode<synchronous>, transform_indices = @transform_6, window_bounds = array<i64: 160, 20>}, {pipeline_mode = #tpu.pipeline_mode<synchronous>, transform_indices = @transform_7, window_bounds = array<i64: 1, 20>}, {pipeline_mode = #tpu.pipeline_mode<synchronous>, transform_indices = @transform_8, window_bounds = array<i64: 20, 20>}, {pipeline_mode = #tpu.pipeline_mode<synchronous>, transform_indices = @transform_9, window_bounds = array<i64: 16, 20>}]} {
    %c0 = arith.constant 0 : index
    %c0_0 = arith.constant 0 : index
    %0 = vector.load %arg1[%c0, %c0_0] : memref<16x20xf32, #tpu.memory_space<vmem>>, vector<16x20xf32>
    %c0_1 = arith.constant 0 : index
    %c0_2 = arith.constant 0 : index
    %1 = vector.load %arg2[%c0_1, %c0_2] : memref<20x40xf32, #tpu.memory_space<vmem>>, vector<20x40xf32>
    %cst = arith.constant dense<0.000000e+00> : vector<16x40xf32>
    %2 = tpu.matmul %0, %1, %cst {dimension_numbers = #tpu.dot_dimension_numbers<[1], [0], [0], [1], [0, 0, 1, 1], [], []>} : vector<16x20xf32>, vector<20x40xf32>, vector<16x40xf32> -> vector<16x40xf32>
    %c0_3 = arith.constant 0 : index
    %c0_4 = arith.constant 0 : index
    %3 = vector.load %arg3[%c0_3, %c0_4] : memref<40x160xf32, #tpu.memory_space<vmem>>, vector<40x160xf32>
    %cst_5 = arith.constant dense<0.000000e+00> : vector<16x160xf32>
    %4 = tpu.matmul %2, %3, %cst_5 {dimension_numbers = #tpu.dot_dimension_numbers<[1], [0], [0], [1], [0, 0, 1, 1], [], []>} : vector<16x40xf32>, vector<40x160xf32>, vector<16x160xf32> -> vector<16x160xf32>
    %c0_6 = arith.constant 0 : index
    %c0_7 = arith.constant 0 : index
    %5 = vector.load %arg4[%c0_6, %c0_7] : memref<1x160xf32, #tpu.memory_space<vmem>>, vector<1x160xf32>
    %6 = vector.broadcast %5 : vector<1x160xf32> to vector<16x160xf32>
    %7 = arith.addf %4, %6 : vector<16x160xf32>
    %8 = arith.negf %7 : vector<16x160xf32>
    %9 = math.exp %8 : vector<16x160xf32>
    %cst_8 = arith.constant 1.000000e+00 : f32
    %10 = vector.broadcast %cst_8 : f32 to vector<16x160xf32>
    %11 = arith.addf %10, %9 : vector<16x160xf32>
    %12 = arith.divf %10, %11 : vector<16x160xf32>
    %13 = arith.mulf %7, %12 : vector<16x160xf32>
    %c0_9 = arith.constant 0 : index
    %c0_10 = arith.constant 0 : index
    %c0_11 = arith.constant 0 : index
    %14 = vector.load %arg5[%c0_9, %c0_10, %c0_11] : memref<2x160x160xf32, #tpu.memory_space<vmem>>, vector<1x160x160xf32>
    %15 = vector.shape_cast %14 : vector<1x160x160xf32> to vector<160x160xf32>
    %cst_12 = arith.constant dense<0.000000e+00> : vector<16x160xf32>
    %16 = tpu.matmul %13, %15, %cst_12 {dimension_numbers = #tpu.dot_dimension_numbers<[1], [0], [0], [1], [0, 0, 1, 1], [], []>} : vector<16x160xf32>, vector<160x160xf32>, vector<16x160xf32> -> vector<16x160xf32>
    %c0_13 = arith.constant 0 : index
    %c0_14 = arith.constant 0 : index
    %c0_15 = arith.constant 0 : index
    %17 = vector.load %arg6[%c0_13, %c0_14, %c0_15] : memref<2x1x160xf32, #tpu.memory_space<vmem>>, vector<1x1x160xf32>
    %18 = vector.shape_cast %17 : vector<1x1x160xf32> to vector<1x160xf32>
    %19 = vector.broadcast %18 : vector<1x160xf32> to vector<16x160xf32>
    %20 = arith.addf %16, %19 : vector<16x160xf32>
    %21 = arith.negf %20 : vector<16x160xf32>
    %22 = math.exp %21 : vector<16x160xf32>
    %cst_16 = arith.constant 1.000000e+00 : f32
    %23 = vector.broadcast %cst_16 : f32 to vector<16x160xf32>
    %24 = arith.addf %23, %22 : vector<16x160xf32>
    %25 = arith.divf %23, %24 : vector<16x160xf32>
    %26 = arith.mulf %20, %25 : vector<16x160xf32>
    %c1 = arith.constant 1 : index
    %c0_17 = arith.constant 0 : index
    %c0_18 = arith.constant 0 : index
    %27 = vector.load %arg5[%c1, %c0_17, %c0_18] : memref<2x160x160xf32, #tpu.memory_space<vmem>>, vector<1x160x160xf32>
    %28 = vector.shape_cast %27 : vector<1x160x160xf32> to vector<160x160xf32>
    %cst_19 = arith.constant dense<0.000000e+00> : vector<16x160xf32>
    %29 = tpu.matmul %26, %28, %cst_19 {dimension_numbers = #tpu.dot_dimension_numbers<[1], [0], [0], [1], [0, 0, 1, 1], [], []>} : vector<16x160xf32>, vector<160x160xf32>, vector<16x160xf32> -> vector<16x160xf32>
    %c1_20 = arith.constant 1 : index
    %c0_21 = arith.constant 0 : index
    %c0_22 = arith.constant 0 : index
    %30 = vector.load %arg6[%c1_20, %c0_21, %c0_22] : memref<2x1x160xf32, #tpu.memory_space<vmem>>, vector<1x1x160xf32>
    %31 = vector.shape_cast %30 : vector<1x1x160xf32> to vector<1x160xf32>
    %32 = vector.broadcast %31 : vector<1x160xf32> to vector<16x160xf32>
    %33 = arith.addf %29, %32 : vector<16x160xf32>
    %34 = arith.negf %33 : vector<16x160xf32>
    %35 = math.exp %34 : vector<16x160xf32>
    %cst_23 = arith.constant 1.000000e+00 : f32
    %36 = vector.broadcast %cst_23 : f32 to vector<16x160xf32>
    %37 = arith.addf %36, %35 : vector<16x160xf32>
    %38 = arith.divf %36, %37 : vector<16x160xf32>
    %39 = arith.mulf %33, %38 : vector<16x160xf32>
    %c0_24 = arith.constant 0 : index
    %c0_25 = arith.constant 0 : index
    %40 = vector.load %arg7[%c0_24, %c0_25] : memref<160x20xf32, #tpu.memory_space<vmem>>, vector<160x20xf32>
    %cst_26 = arith.constant dense<0.000000e+00> : vector<16x20xf32>
    %41 = tpu.matmul %39, %40, %cst_26 {dimension_numbers = #tpu.dot_dimension_numbers<[1], [0], [0], [1], [0, 0, 1, 1], [], []>} : vector<16x160xf32>, vector<160x20xf32>, vector<16x20xf32> -> vector<16x20xf32>
    %c0_27 = arith.constant 0 : index
    %c0_28 = arith.constant 0 : index
    %42 = vector.load %arg8[%c0_27, %c0_28] : memref<1x20xf32, #tpu.memory_space<vmem>>, vector<1x20xf32>
    %43 = vector.broadcast %42 : vector<1x20xf32> to vector<16x20xf32>
    %44 = arith.addf %41, %43 : vector<16x20xf32>
    %c0_29 = arith.constant 0 : index
    %c0_30 = arith.constant 0 : index
    %45 = vector.load %arg9[%c0_29, %c0_30] : memref<20x20xf32, #tpu.memory_space<vmem>>, vector<20x20xf32>
    %cst_31 = arith.constant dense<0.000000e+00> : vector<16x20xf32>
    %46 = tpu.matmul %44, %45, %cst_31 {dimension_numbers = #tpu.dot_dimension_numbers<[1], [0], [0], [1], [0, 0, 1, 1], [], []>} : vector<16x20xf32>, vector<20x20xf32>, vector<16x20xf32> -> vector<16x20xf32>
    %c0_32 = arith.constant 0 : index
    %c0_33 = arith.constant 0 : index
    %47 = vector.load %arg10[%c0_32, %c0_33] : memref<16x20xf32, #tpu.memory_space<vmem>>, vector<16x20xf32>
    tpu.vector_store %arg10[%c0_32, %c0_33], %46 {strides = array<i32>} : memref<16x20xf32, #tpu.memory_space<vmem>>, vector<16x20xf32>,
    return
  }
  func.func @transform_0(%arg0: i32) -> (i32, i32) {
    %c0_i32 = arith.constant 0 : i32
    %c0_i32_0 = arith.constant 0 : i32
    %c0_i32_1 = arith.constant 0 : i32
    return %c0_i32, %c0_i32_0 : i32, i32
  }
  func.func @transform_1(%arg0: i32) -> (i32, i32) {
    %c0_i32 = arith.constant 0 : i32
    %c0_i32_0 = arith.constant 0 : i32
    %c0_i32_1 = arith.constant 0 : i32
    return %c0_i32, %c0_i32_0 : i32, i32
  }
  func.func @transform_2(%arg0: i32) -> (i32, i32) {
    %c0_i32 = arith.constant 0 : i32
    %c0_i32_0 = arith.constant 0 : i32
    %c0_i32_1 = arith.constant 0 : i32
    return %c0_i32, %c0_i32_0 : i32, i32
  }
  func.func @transform_3(%arg0: i32) -> (i32, i32) {
    %c0_i32 = arith.constant 0 : i32
    %c0_i32_0 = arith.constant 0 : i32
    %c0_i32_1 = arith.constant 0 : i32
    return %c0_i32, %c0_i32_0 : i32, i32
  }
  func.func @transform_4(%arg0: i32) -> (i32, i32, i32) {
    %c0_i32 = arith.constant 0 : i32
    %c0_i32_0 = arith.constant 0 : i32
    %c0_i32_1 = arith.constant 0 : i32
    %c0_i32_2 = arith.constant 0 : i32
    return %c0_i32, %c0_i32_0, %c0_i32_1 : i32, i32, i32
  }
  func.func @transform_5(%arg0: i32) -> (i32, i32, i32) {
    %c0_i32 = arith.constant 0 : i32
    %c0_i32_0 = arith.constant 0 : i32
    %c0_i32_1 = arith.constant 0 : i32
    %c0_i32_2 = arith.constant 0 : i32
    return %c0_i32, %c0_i32_0, %c0_i32_1 : i32, i32, i32
  }
  func.func @transform_6(%arg0: i32) -> (i32, i32) {
    %c0_i32 = arith.constant 0 : i32
    %c0_i32_0 = arith.constant 0 : i32
    %c0_i32_1 = arith.constant 0 : i32
    return %c0_i32, %c0_i32_0 : i32, i32
  }
  func.func @transform_7(%arg0: i32) -> (i32, i32) {
    %c0_i32 = arith.constant 0 : i32
    %c0_i32_0 = arith.constant 0 : i32
    %c0_i32_1 = arith.constant 0 : i32
    return %c0_i32, %c0_i32_0 : i32, i32
  }
  func.func @transform_8(%arg0: i32) -> (i32, i32) {
    %c0_i32 = arith.constant 0 : i32
    %c0_i32_0 = arith.constant 0 : i32
    %c0_i32_1 = arith.constant 0 : i32
    return %c0_i32, %c0_i32_0 : i32, i32
  }
  func.func @transform_9(%arg0: i32) -> (i32, i32) {
    %c0_i32 = arith.constant 0 : i32
    %c0_i32_0 = arith.constant 0 : i32
    %c0_i32_1 = arith.constant 0 : i32
    return %c0_i32, %c0_i32_0 : i32, i32
  }
}

</mosaic_0001>

<llo_original>
// kernel: rel_mot_forward.1
$region0: #{rel_mot_forward.1}
  #allocation0 [shape = 'u32[]', space=smem, size = 0x4, offset = 0x4, fixed_abs, tag = 'smem constant byte address 0x4 - core index']
  #allocation1 [shape = 'u32[144,128]{1,0:T(1,128)}', space=vmem, size = 0x12000, scoped, tag = 'internal scratch']
  %s0 = inlined_call_operand.vmem [shape: f32[16,20], index: 0, kind: input, shape index: {}]
  %s1 = inlined_call_operand.vmem [shape: f32[20,40], index: 1, kind: input, shape index: {}]
  %s2 = inlined_call_operand.vmem [shape: f32[40,160], index: 2, kind: input, shape index: {}]
  %s3 = inlined_call_operand.vmem [shape: f32[1,160], index: 3, kind: input, shape index: {}]
  %s4 = inlined_call_operand.hbm [shape: f32[2,160,160], index: 4, kind: input, shape index: {}]
  %s5 = inlined_call_operand.vmem [shape: f32[2,1,160], index: 5, kind: input, shape index: {}]
  %s6 = inlined_call_operand.vmem [shape: f32[160,20], index: 6, kind: input, shape index: {}]
  %s7 = inlined_call_operand.vmem [shape: f32[1,20], index: 7, kind: input, shape index: {}]
  %s8 = inlined_call_operand.vmem [shape: f32[20,20], index: 8, kind: input, shape index: {}]
  %s9 = inlined_call_operand.vmem [shape: f32[16,20], index: 9, kind: output, shape index: {}]
  %s10 = sld [smem:[#allocation0]]
  $region50: #{rel_mot_forward.1} parent=0
    _
  %s12 = ssub.s32 1, %s10
  %s13 = scalar_select 0, %s12, %s10
  $region1: #{rel_mot_forward.1} parent=0
    #allocation2 [shape = 'u8[327680]{0}', space=vmem, size = 0x50000, scoped, tag = 'input window, operand 4, single buffered']
    #allocation3 [shape = 's32[1]{0}', space=sflag, size = 0x4, scoped, tag = 'scoped memory for rel_mot_forward.1']
    %14 = vsyncpa [#allocation3], 0
    // Predicated region
    $region2: #{rel_mot_forward.1} parent=1 // pred_check
      _
    $region3: #{rel_mot_forward.1} parent=1 // pred_check_branch
      %16 = sbr.rel (0) target = $region5
    $region4: #{rel_mot_forward.1} parent=1 // pred_region
      _
    $region5: #{rel_mot_forward.1} parent=1 // pred_fallthru
      _
    // Predicated region
    $region6: #{rel_mot_forward.1} parent=1 // pred_check
      _
    $region7: #{rel_mot_forward.1} parent=1 // pred_check_branch
      %18 = sbr.rel (0) target = $region9
    $region8: #{rel_mot_forward.1} parent=1 // pred_region
      _
    $region9: #{rel_mot_forward.1} parent=1 // pred_fallthru
      _
    // Predicated region
    $region10: #{rel_mot_forward.1} parent=1 // pred_check
      _
    $region11: #{rel_mot_forward.1} parent=1 // pred_check_branch
      %20 = sbr.rel (0) target = $region13
    $region12: #{rel_mot_forward.1} parent=1 // pred_region
      _
    $region13: #{rel_mot_forward.1} parent=1 // pred_fallthru
      _
    // Predicated region
    $region14: #{rel_mot_forward.1} parent=1 // pred_check
      _
    $region15: #{rel_mot_forward.1} parent=1 // pred_check_branch
      %22 = sbr.rel (0) target = $region17
    $region16: #{rel_mot_forward.1} parent=1 // pred_region
      _
    $region17: #{rel_mot_forward.1} parent=1 // pred_fallthru
      _
    // Predicated region
    $region18: #{rel_mot_forward.1} parent=1 // pred_check
      _
    $region19: #{rel_mot_forward.1} parent=1 // pred_check_branch
      %24 = sbr.rel (0) target = $region21
    $region20: #{rel_mot_forward.1} parent=1 // pred_region
      %s26 = ssub.s32 10240, 10240
      %27 = vsyncadd [#allocation3], %s26
      %s28 = sshll.u32 [#allocation2], 4
      %s29 = int_to_ptr.vmem [resolvable:$true] %s28
      %34 = dma.hbm_to_vmem [thread:$0]  %s4, 10240, %s29, [#allocation3], 256, 256, 16
    $region21: #{rel_mot_forward.1} parent=1 // pred_fallthru
      _
    // Predicated region
    $region22: #{rel_mot_forward.1} parent=1 // pred_check
      _
    $region23: #{rel_mot_forward.1} parent=1 // pred_check_branch
      %36 = sbr.rel (0) target = $region25
    $region24: #{rel_mot_forward.1} parent=1 // pred_region
      _
    $region25: #{rel_mot_forward.1} parent=1 // pred_fallthru
      _
    // Predicated region
    $region26: #{rel_mot_forward.1} parent=1 // pred_check
      _
    $region27: #{rel_mot_forward.1} parent=1 // pred_check_branch
      %38 = sbr.rel (0) target = $region29
    $region28: #{rel_mot_forward.1} parent=1 // pred_region
      _
    $region29: #{rel_mot_forward.1} parent=1 // pred_fallthru
      _
    // Predicated region
    $region30: #{rel_mot_forward.1} parent=1 // pred_check
      _
    $region31: #{rel_mot_forward.1} parent=1 // pred_check_branch
      %40 = sbr.rel (0) target = $region33
    $region32: #{rel_mot_forward.1} parent=1 // pred_region
      _
    $region33: #{rel_mot_forward.1} parent=1 // pred_fallthru
      _
    // Predicated region
    $region34: #{rel_mot_forward.1} parent=1 // pred_check
      _
    $region35: #{rel_mot_forward.1} parent=1 // pred_check_branch
      %42 = sbr.rel (0) target = $region37
    $region36: #{rel_mot_forward.1} parent=1 // pred_region
      _
    $region37: #{rel_mot_forward.1} parent=1 // pred_fallthru
      _
    // Predicated region
    $region38: #{rel_mot_forward.1} parent=1 // pred_check
      _
    $region39: #{rel_mot_forward.1} parent=1 // pred_check_branch
      %44 = sbr.rel (0) target = $region41
    $region40: #{rel_mot_forward.1} parent=1 // pred_region
      %45 = dma.done [#allocation3], 10240
    $region41: #{rel_mot_forward.1} parent=1 // pred_fallthru
      _
    %v46 = vld [vmem:[%s0] sm:$0xff]
    %v47 = vld [vmem:[%s0 + $0x8] sm:$0xff]
    %v48 = vld [vmem:[%s1] sm:$0xff]
    %v49 = vld [vmem:[%s1 + $0x8] sm:$0xff]
    %v50 = vld [vmem:[%s1 + $0x10] sm:$0xf]
    %vm51 = vcmask 162816
    %v53 = vsel %vm51, %v46, 0
    %v56 = vsel %vm51, %v47, 0
    %vm58 = vcmask 1043456
    %v60 = vsel %vm58, %v50, 0
    %62 = vmatprep.subr.mxu0 0.0
    %63 = vmatpush1.msra.mxu0 %v48
    %64 = vmatprep.subr.mxu0 0.0
    %65 = vmatpush1.msra.mxu0 %v49
    %66 = vmatprep.subr.mxu0 0.0
    %67 = vmatpush1.msra.mxu0 %v60
    %68 = vmatprep.subr.mxu0 0.0
    %69 = vmatpush1.msra.mxu0 0.0
    %70 = vmatprep.subr.mxu0 0.0
    %71 = vmatpush1.msra.mxu0 0.0
    %72 = vmatprep.subr.mxu0 0.0
    %73 = vmatpush1.msra.mxu0 0.0
    %74 = vmatprep.subr.mxu0 0.0
    %75 = vmatpush1.msra.mxu0 0.0
    %76 = vmatprep.subr.mxu0 0.0
    %77 = vmatpush1.msra.mxu0 0.0
    %78 = vmatprep.subr.mxu0 0.0
    %79 = vmatpush1.msra.mxu0 0.0
    %80 = vmatprep.subr.mxu0 0.0
    %81 = vmatpush1.msra.mxu0 0.0
    %82 = vmatprep.subr.mxu0 0.0
    %83 = vmatpush1.msra.mxu0 0.0
    %84 = vmatprep.subr.mxu0 0.0
    %85 = vmatpush1.msra.mxu0 0.0
    %86 = vmatprep.subr.mxu0 0.0
    %87 = vmatpush1.msra.mxu0 0.0
    %88 = vmatprep.subr.mxu0 0.0
    %89 = vmatpush1.msra.mxu0 0.0
    %90 = vmatprep.subr.mxu0 0.0
    %91 = vmatpush1.msra.mxu0 0.0
    %92 = vmatprep.subr.mxu0 0.0
    %93 = vmatpush1.msra.mxu0 0.0
    %94 = vmatprep.subr.mxu0 0.0
    %95 = vmatpush1.msra.mxu0 0.0
    %96 = vmatprep.subr.mxu0 0.0
    %97 = vmatpush1.msra.mxu0 0.0
    %98 = vmatprep.subr.mxu0 0.0
    %99 = vmatpush1.msra.mxu0 0.0
    %100 = vmatprep.subr.mxu0 0.0
    %101 = vmatpush1.msra.mxu0 0.0
    %102 = vmatprep.subr.mxu0 0.0
    %103 = vmatpush1.msra.mxu0 0.0
    %104 = vmatprep.subr.mxu0 0.0
    %105 = vmatpush1.msra.mxu0 0.0
    %106 = vmatprep.subr.mxu0 0.0
    %107 = vmatpush1.msra.mxu0 0.0
    %108 = vmatprep.subr.mxu0 0.0
    %109 = vmatpush1.msra.mxu0 0.0
    %110 = vmatprep.subr.mxu0 0.0
    %111 = vmatpush1.msra.mxu0 0.0
    %112 = vmatprep.subr.mxu0 0.0
    %113 = vmatpush1.msra.mxu0 0.0
    %114 = vmatprep.subr.mxu0 0.0
    %115 = vmatpush1.msra.mxu0 0.0
    %116 = vmatprep.subr.mxu0 0.0
    %117 = vmatpush1.msra.mxu0 0.0
    %118 = vmatprep.subr.mxu0 0.0
    %119 = vmatpush1.msra.mxu0 0.0
    %120 = vmatprep.subr.mxu0 0.0
    %121 = vmatpush1.msra.mxu0 0.0
    %122 = vmatprep.subr.mxu0 0.0
    %123 = vmatpush1.msra.mxu0 0.0
    %124 = vmatprep.subr.mxu0 0.0
    %125 = vmatpush1.msra.mxu0 0.0
    %126 = vmatprep.mubr.f32.mxu0 0.0
    %127 = vmatmul.mubr.f32.gmra.mrb[0].mxu0 %v53
    %v128 = vpop.f32.mrb[0].mxu0
    %v129 = vadd.f32 0.0, %v128
    %v130 = vpop.f32.mrb[0].mxu0
    %131 = vmatprep.mubr.f32.mxu0 0.0
    %132 = vmatmul.mubr.f32.gmra.mrb[0].mxu0 %v56
    %v133 = vpop.f32.mrb[0].mxu0
    %v134 = vadd.f32 0.0, %v133
    %v135 = vpop.f32.mrb[0].mxu0
    %136 = vdwg.mxu0
    %v137 = vld [vmem:[%s2] sm:$0xff]
    %v138 = vld [vmem:[%s2 + $0x8] sm:$0xff]
    %v139 = vld [vmem:[%s2 + $0x10] sm:$0xff]
    %v140 = vld [vmem:[%s2 + $0x18] sm:$0xff]
    %v141 = vld [vmem:[%s2 + $0x20] sm:$0xff]
    %v142 = vld [vmem:[%s2 + $0x28] sm:$0xff]
    %v143 = vld [vmem:[%s2 + $0x30] sm:$0xff]
    %v144 = vld [vmem:[%s2 + $0x38] sm:$0xff]
    %v145 = vld [vmem:[%s2 + $0x40] sm:$0xff]
    %v146 = vld [vmem:[%s2 + $0x48] sm:$0xff]
    %v147 = vld [vmem:[%s3] sm:$0x3]
    %v149 = vlaneseq
    %v150 = vshrl.u32 %v149, 7
    %v151 = vsub.s32 0, %v150
    %v152 = vrot.slane %v147, %v151
    %v153 = vlaneseq
    %v154 = vshrl.u32 %v153, 7
    %v155 = vsub.s32 1, %v154
    %v156 = vrot.slane %v147, %v155
    %vm159 = vcmask 326656
    %v161 = vsel %vm159, %v129, 0
    %v164 = vsel %vm159, %v134, 0
    %166 = vmatprep.subr.mxu0 %v138
    %167 = vmatpush1.msra.mxu0 %v137
    %168 = vmatprep.subr.mxu0 %v140
    %169 = vmatpush1.msra.mxu0 %v139
    %170 = vmatprep.subr.mxu0 %v142
    %171 = vmatpush1.msra.mxu0 %v141
    %172 = vmatprep.subr.mxu0 %v144
    %173 = vmatpush1.msra.mxu0 %v143
    %174 = vmatprep.subr.mxu0 %v146
    %175 = vmatpush1.msra.mxu0 %v145
    %176 = vmatprep.subr.mxu0 0.0
    %177 = vmatpush1.msra.mxu0 0.0
    %178 = vmatprep.subr.mxu0 0.0
    %179 = vmatpush1.msra.mxu0 0.0
    %180 = vmatprep.subr.mxu0 0.0
    %181 = vmatpush1.msra.mxu0 0.0
    %182 = vmatprep.subr.mxu0 0.0
    %183 = vmatpush1.msra.mxu0 0.0
    %184 = vmatprep.subr.mxu0 0.0
    %185 = vmatpush1.msra.mxu0 0.0
    %186 = vmatprep.subr.mxu0 0.0
    %187 = vmatpush1.msra.mxu0 0.0
    %188 = vmatprep.subr.mxu0 0.0
    %189 = vmatpush1.msra.mxu0 0.0
    %190 = vmatprep.subr.mxu0 0.0
    %191 = vmatpush1.msra.mxu0 0.0
    %192 = vmatprep.subr.mxu0 0.0
    %193 = vmatpush1.msra.mxu0 0.0
    %194 = vmatprep.subr.mxu0 0.0
    %195 = vmatpush1.msra.mxu0 0.0
    %196 = vmatprep.subr.mxu0 0.0
    %197 = vmatpush1.msra.mxu0 0.0
    %198 = vmatprep.subr.mxu0 0.0
    %199 = vmatpush1.msra.mxu0 0.0
    %200 = vmatprep.subr.mxu0 0.0
    %201 = vmatpush1.msra.mxu0 0.0
    %202 = vmatprep.subr.mxu0 0.0
    %203 = vmatpush1.msra.mxu0 0.0
    %204 = vmatprep.subr.mxu0 0.0
    %205 = vmatpush1.msra.mxu0 0.0
    %206 = vmatprep.subr.mxu0 0.0
    %207 = vmatpush1.msra.mxu0 0.0
    %208 = vmatprep.subr.mxu0 0.0
    %209 = vmatpush1.msra.mxu0 0.0
    %210 = vmatprep.subr.mxu0 0.0
    %211 = vmatpush1.msra.mxu0 0.0
    %212 = vmatprep.subr.mxu0 0.0
    %213 = vmatpush1.msra.mxu0 0.0
    %214 = vmatprep.subr.mxu0 0.0
    %215 = vmatpush1.msra.mxu0 0.0
    %216 = vmatprep.subr.mxu0 0.0
    %217 = vmatpush1.msra.mxu0 0.0
    %218 = vmatprep.subr.mxu0 0.0
    %219 = vmatpush1.msra.mxu0 0.0
    %220 = vmatprep.subr.mxu0 0.0
    %221 = vmatpush1.msra.mxu0 0.0
    %222 = vmatprep.subr.mxu0 0.0
    %223 = vmatpush1.msra.mxu0 0.0
    %224 = vmatprep.subr.mxu0 0.0
    %225 = vmatpush1.msra.mxu0 0.0
    %226 = vmatprep.subr.mxu0 0.0
    %227 = vmatpush1.msra.mxu0 0.0
    %228 = vmatprep.subr.mxu0 0.0
    %229 = vmatpush1.msra.mxu0 0.0
    %230 = vmatprep.mubr.f32.mxu0 0.0
    %231 = vmatmul.mubr.f32.gmra.mrb[0].mxu0 %v161
    %v232 = vpop.f32.mrb[0].mxu0
    %v233 = vadd.f32 %v152, %v232
    %v234 = vpop.f32.mrb[0].mxu0
    %v235 = vadd.f32 %v156, %v234
    %236 = vmatprep.mubr.f32.mxu0 0.0
    %237 = vmatmul.mubr.f32.gmra.mrb[0].mxu0 %v164
    %v238 = vpop.f32.mrb[0].mxu0
    %v239 = vadd.f32 %v152, %v238
    %v240 = vpop.f32.mrb[0].mxu0
    %v241 = vadd.f32 %v156, %v240
    %242 = vdwg.mxu0
    %v243 = vxor.u32 %v233, 2147483648
    %v244 = vxor.u32 %v235, 2147483648
    %v245 = vxor.u32 %v239, 2147483648
    %v246 = vxor.u32 %v241, 2147483648
    %v247 = vmul.f32 %v243, 1.442695
    %v248 = vpow.pop %v247
    %v249 = vmul.f32 %v244, 1.442695
    %v250 = vpow.pop %v249
    %v251 = vmul.f32 %v245, 1.442695
    %v252 = vpow.pop %v251
    %v253 = vmul.f32 %v246, 1.442695
    %v254 = vpow.pop %v253
    %v255 = vadd.f32 %v248, 1.0
    %v256 = vadd.f32 %v250, 1.0
    %v257 = vadd.f32 %v252, 1.0
    %v258 = vadd.f32 %v254, 1.0
    %v259 = vrcp.pop %v255
    %v260 = vmul.f32 1.0, %v259
    %v261 = vrcp.pop %v256
    %v262 = vmul.f32 1.0, %v261
    %v263 = vrcp.pop %v257
    %v264 = vmul.f32 1.0, %v263
    %v265 = vrcp.pop %v258
    %v266 = vmul.f32 1.0, %v265
    %v267 = vmul.f32 %v233, %v260
    %v268 = vmul.f32 %v235, %v262
    %v269 = vmul.f32 %v239, %v264
    %v270 = vmul.f32 %v241, %v266
    %v271 = vld [vmem:[#allocation2] sm:$0xff]
    %v272 = vld [vmem:[#allocation2 + $0x8] sm:$0xff]
    %v273 = vld [vmem:[#allocation2 + $0x10] sm:$0xff]
    %v274 = vld [vmem:[#allocation2 + $0x18] sm:$0xff]
    %v275 = vld [vmem:[#allocation2 + $0x20] sm:$0xff]
    %v276 = vld [vmem:[#allocation2 + $0x28] sm:$0xff]
    %v277 = vld [vmem:[#allocation2 + $0x30] sm:$0xff]
    %v278 = vld [vmem:[#allocation2 + $0x38] sm:$0xff]
    %v279 = vld [vmem:[#allocation2 + $0x40] sm:$0xff]
    %v280 = vld [vmem:[#allocation2 + $0x48] sm:$0xff]
    %v281 = vld [vmem:[#allocation2 + $0x50] sm:$0xff]
    %v282 = vld [vmem:[#allocation2 + $0x58] sm:$0xff]
    %v283 = vld [vmem:[#allocation2 + $0x60] sm:$0xff]
    %v284 = vld [vmem:[#allocation2 + $0x68] sm:$0xff]
    %v285 = vld [vmem:[#allocation2 + $0x70] sm:$0xff]
    %v286 = vld [vmem:[#allocation2 + $0x78] sm:$0xff]
    %v287 = vld [vmem:[#allocation2 + $0x80] sm:$0xff]
    %v288 = vld [vmem:[#allocation2 + $0x88] sm:$0xff]
    %v289 = vld [vmem:[#allocation2 + $0x90] sm:$0xff]
    %v290 = vld [vmem:[#allocation2 + $0x98] sm:$0xff]
    %v291 = vld [vmem:[#allocation2 + $0xa0] sm:$0xff]
    %v292 = vld [vmem:[#allocation2 + $0xa8] sm:$0xff]
    %v293 = vld [vmem:[#allocation2 + $0xb0] sm:$0xff]
    %v294 = vld [vmem:[#allocation2 + $0xb8] sm:$0xff]
    %v295 = vld [vmem:[#allocation2 + $0xc0] sm:$0xff]
    %v296 = vld [vmem:[#allocation2 + $0xc8] sm:$0xff]
    %v297 = vld [vmem:[#allocation2 + $0xd0] sm:$0xff]
    %v298 = vld [vmem:[#allocation2 + $0xd8] sm:$0xff]
    %v299 = vld [vmem:[#allocation2 + $0xe0] sm:$0xff]
    %v300 = vld [vmem:[#allocation2 + $0xe8] sm:$0xff]
    %v301 = vld [vmem:[#allocation2 + $0xf0] sm:$0xff]
    %v302 = vld [vmem:[#allocation2 + $0xf8] sm:$0xff]
    %v303 = vld [vmem:[#allocation2 + $0x100] sm:$0xff]
    %v304 = vld [vmem:[#allocation2 + $0x108] sm:$0xff]
    %v305 = vld [vmem:[#allocation2 + $0x110] sm:$0xff]
    %v306 = vld [vmem:[#allocation2 + $0x118] sm:$0xff]
    %v307 = vld [vmem:[#allocation2 + $0x120] sm:$0xff]
    %v308 = vld [vmem:[#allocation2 + $0x128] sm:$0xff]
    %v309 = vld [vmem:[#allocation2 + $0x130] sm:$0xff]
    %v310 = vld [vmem:[#allocation2 + $0x138] sm:$0xff]
    %v311 = vld [vmem:[%s5] sm:$0x3]
    %v313 = vlaneseq
    %v314 = vshrl.u32 %v313, 7
    %v315 = vsub.s32 0, %v314
    %v316 = vrot.slane %v311, %v315
    %v317 = vlaneseq
    %v318 = vshrl.u32 %v317, 7
    %v319 = vsub.s32 1, %v318
    %v320 = vrot.slane %v311, %v319
    %vm323 = vcmask 261120
    %v325 = vsel %vm323, %v268, 0
    %v328 = vsel %vm323, %v270, 0
    %330 = vmatprep.subr.mxu0 %v272
    %331 = vmatpush1.msra.mxu0 %v271
    %332 = vmatprep.subr.mxu0 %v274
    %333 = vmatpush1.msra.mxu0 %v273
    %334 = vmatprep.subr.mxu0 %v276
    %335 = vmatpush1.msra.mxu0 %v275
    %336 = vmatprep.subr.mxu0 %v278
    %337 = vmatpush1.msra.mxu0 %v277
    %338 = vmatprep.subr.mxu0 %v280
    %339 = vmatpush1.msra.mxu0 %v279
    %340 = vmatprep.subr.mxu0 %v282
    %341 = vmatpush1.msra.mxu0 %v281
    %342 = vmatprep.subr.mxu0 %v284
    %343 = vmatpush1.msra.mxu0 %v283
    %344 = vmatprep.subr.mxu0 %v286
    %345 = vmatpush1.msra.mxu0 %v285
    %346 = vmatprep.subr.mxu0 %v288
    %347 = vmatpush1.msra.mxu0 %v287
    %348 = vmatprep.subr.mxu0 %v290
    %349 = vmatpush1.msra.mxu0 %v289
    %350 = vmatprep.subr.mxu0 %v292
    %351 = vmatpush1.msra.mxu0 %v291
    %352 = vmatprep.subr.mxu0 %v294
    %353 = vmatpush1.msra.mxu0 %v293
    %354 = vmatprep.subr.mxu0 %v296
    %355 = vmatpush1.msra.mxu0 %v295
    %356 = vmatprep.subr.mxu0 %v298
    %357 = vmatpush1.msra.mxu0 %v297
    %358 = vmatprep.subr.mxu0 %v300
    %359 = vmatpush1.msra.mxu0 %v299
    %360 = vmatprep.subr.mxu0 %v302
    %361 = vmatpush1.msra.mxu0 %v301
    %362 = vmatprep.subr.mxu0 %v304
    %363 = vmatpush1.msra.mxu0 %v303
    %364 = vmatprep.subr.mxu0 %v306
    %365 = vmatpush1.msra.mxu0 %v305
    %366 = vmatprep.subr.mxu0 %v308
    %367 = vmatpush1.msra.mxu0 %v307
    %368 = vmatprep.subr.mxu0 %v310
    %369 = vmatpush1.msra.mxu0 %v309
    %370 = vmatprep.subr.mxu0 0.0
    %371 = vmatpush1.msra.mxu0 0.0
    %372 = vmatprep.subr.mxu0 0.0
    %373 = vmatpush1.msra.mxu0 0.0
    %374 = vmatprep.subr.mxu0 0.0
    %375 = vmatpush1.msra.mxu0 0.0
    %376 = vmatprep.subr.mxu0 0.0
    %377 = vmatpush1.msra.mxu0 0.0
    %378 = vmatprep.subr.mxu0 0.0
    %379 = vmatpush1.msra.mxu0 0.0
    %380 = vmatprep.subr.mxu0 0.0
    %381 = vmatpush1.msra.mxu0 0.0
    %382 = vmatprep.subr.mxu0 0.0
    %383 = vmatpush1.msra.mxu0 0.0
    %384 = vmatprep.subr.mxu0 0.0
    %385 = vmatpush1.msra.mxu0 0.0
    %386 = vmatprep.subr.mxu0 0.0
    %387 = vmatpush1.msra.mxu0 0.0
    %388 = vmatprep.subr.mxu0 0.0
    %389 = vmatpush1.msra.mxu0 0.0
    %390 = vmatprep.subr.mxu0 0.0
    %391 = vmatpush1.msra.mxu0 0.0
    %392 = vmatprep.subr.mxu0 0.0
    %393 = vmatpush1.msra.mxu0 0.0
    %394 = vmatprep.mubr.f32.mxu0 %v325
    %395 = vmatmul.mubr.f32.gmra.mrb[0].mxu0 %v267
    %v396 = vpop.f32.mrb[0].mxu0
    %v397 = vadd.f32 %v316, %v396
    %v398 = vpop.f32.mrb[0].mxu0
    %v399 = vadd.f32 %v320, %v398
    %400 = vmatprep.mubr.f32.mxu0 %v328
    %401 = vmatmul.mubr.f32.gmra.mrb[0].mxu0 %v269
    %v402 = vpop.f32.mrb[0].mxu0
    %v403 = vadd.f32 %v316, %v402
    %v404 = vpop.f32.mrb[0].mxu0
    %v405 = vadd.f32 %v320, %v404
    %406 = vdwg.mxu0
    %v407 = vxor.u32 %v397, 2147483648
    %v408 = vxor.u32 %v399, 2147483648
    %v409 = vxor.u32 %v403, 2147483648
    %v410 = vxor.u32 %v405, 2147483648
    %v411 = vmul.f32 %v407, 1.442695
    %v412 = vpow.pop %v411
    %v413 = vmul.f32 %v408, 1.442695
    %v414 = vpow.pop %v413
    %v415 = vmul.f32 %v409, 1.442695
    %v416 = vpow.pop %v415
    %v417 = vmul.f32 %v410, 1.442695
    %v418 = vpow.pop %v417
    %v419 = vadd.f32 %v412, 1.0
    %v420 = vadd.f32 %v414, 1.0
    %v421 = vadd.f32 %v416, 1.0
    %v422 = vadd.f32 %v418, 1.0
    %v423 = vrcp.pop %v419
    %v424 = vmul.f32 1.0, %v423
    %v425 = vrcp.pop %v420
    %v426 = vmul.f32 1.0, %v425
    %v427 = vrcp.pop %v421
    %v428 = vmul.f32 1.0, %v427
    %v429 = vrcp.pop %v422
    %v430 = vmul.f32 1.0, %v429
    %v431 = vmul.f32 %v397, %v424
    %v432 = vmul.f32 %v399, %v426
    %v433 = vmul.f32 %v403, %v428
    %v434 = vmul.f32 %v405, %v430
    %s435 = scalar_lea.vmem [#allocation2], 320
    %v436 = vld [vmem:[%s435] sm:$0xff]
    %v437 = vld [vmem:[%s435 + $0x8] sm:$0xff]
    %v438 = vld [vmem:[%s435 + $0x10] sm:$0xff]
    %v439 = vld [vmem:[%s435 + $0x18] sm:$0xff]
    %v440 = vld [vmem:[%s435 + $0x20] sm:$0xff]
    %v441 = vld [vmem:[%s435 + $0x28] sm:$0xff]
    %v442 = vld [vmem:[%s435 + $0x30] sm:$0xff]
    %v443 = vld [vmem:[%s435 + $0x38] sm:$0xff]
    %v444 = vld [vmem:[%s435 + $0x40] sm:$0xff]
    %v445 = vld [vmem:[%s435 + $0x48] sm:$0xff]
    %v446 = vld [vmem:[%s435 + $0x50] sm:$0xff]
    %v447 = vld [vmem:[%s435 + $0x58] sm:$0xff]
    %v448 = vld [vmem:[%s435 + $0x60] sm:$0xff]
    %v449 = vld [vmem:[%s435 + $0x68] sm:$0xff]
    %v450 = vld [vmem:[%s435 + $0x70] sm:$0xff]
    %v451 = vld [vmem:[%s435 + $0x78] sm:$0xff]
    %v452 = vld [vmem:[%s435 + $0x80] sm:$0xff]
    %v453 = vld [vmem:[%s435 + $0x88] sm:$0xff]
    %v454 = vld [vmem:[%s435 + $0x90] sm:$0xff]
    %v455 = vld [vmem:[%s435 + $0x98] sm:$0xff]
    %v456 = vld [vmem:[%s435 + $0xa0] sm:$0xff]
    %v457 = vld [vmem:[%s435 + $0xa8] sm:$0xff]
    %v458 = vld [vmem:[%s435 + $0xb0] sm:$0xff]
    %v459 = vld [vmem:[%s435 + $0xb8] sm:$0xff]
    %v460 = vld [vmem:[%s435 + $0xc0] sm:$0xff]
    %v461 = vld [vmem:[%s435 + $0xc8] sm:$0xff]
    %v462 = vld [vmem:[%s435 + $0xd0] sm:$0xff]
    %v463 = vld [vmem:[%s435 + $0xd8] sm:$0xff]
    %v464 = vld [vmem:[%s435 + $0xe0] sm:$0xff]
    %v465 = vld [vmem:[%s435 + $0xe8] sm:$0xff]
    %v466 = vld [vmem:[%s435 + $0xf0] sm:$0xff]
    %v467 = vld [vmem:[%s435 + $0xf8] sm:$0xff]
    %v468 = vld [vmem:[%s435 + $0x100] sm:$0xff]
    %v469 = vld [vmem:[%s435 + $0x108] sm:$0xff]
    %v470 = vld [vmem:[%s435 + $0x110] sm:$0xff]
    %v471 = vld [vmem:[%s435 + $0x118] sm:$0xff]
    %v472 = vld [vmem:[%s435 + $0x120] sm:$0xff]
    %v473 = vld [vmem:[%s435 + $0x128] sm:$0xff]
    %v474 = vld [vmem:[%s435 + $0x130] sm:$0xff]
    %v475 = vld [vmem:[%s435 + $0x138] sm:$0xff]
    %s476 = scalar_lea.vmem %s5, 2
    %v477 = vld [vmem:[%s476] sm:$0x3]
    %v479 = vlaneseq
    %v480 = vshrl.u32 %v479, 7
    %v481 = vsub.s32 0, %v480
    %v482 = vrot.slane %v477, %v481
    %v483 = vlaneseq
    %v484 = vshrl.u32 %v483, 7
    %v485 = vsub.s32 1, %v484
    %v486 = vrot.slane %v477, %v485
    %v490 = vsel %vm323, %v432, 0
    %v493 = vsel %vm323, %v434, 0
    %495 = vmatprep.subr.mxu0 %v437
    %496 = vmatpush1.msra.mxu0 %v436
    %497 = vmatprep.subr.mxu0 %v439
    %498 = vmatpush1.msra.mxu0 %v438
    %499 = vmatprep.subr.mxu0 %v441
    %500 = vmatpush1.msra.mxu0 %v440
    %501 = vmatprep.subr.mxu0 %v443
    %502 = vmatpush1.msra.mxu0 %v442
    %503 = vmatprep.subr.mxu0 %v445
    %504 = vmatpush1.msra.mxu0 %v444
    %505 = vmatprep.subr.mxu0 %v447
    %506 = vmatpush1.msra.mxu0 %v446
    %507 = vmatprep.subr.mxu0 %v449
    %508 = vmatpush1.msra.mxu0 %v448
    %509 = vmatprep.subr.mxu0 %v451
    %510 = vmatpush1.msra.mxu0 %v450
    %511 = vmatprep.subr.mxu0 %v453
    %512 = vmatpush1.msra.mxu0 %v452
    %513 = vmatprep.subr.mxu0 %v455
    %514 = vmatpush1.msra.mxu0 %v454
    %515 = vmatprep.subr.mxu0 %v457
    %516 = vmatpush1.msra.mxu0 %v456
    %517 = vmatprep.subr.mxu0 %v459
    %518 = vmatpush1.msra.mxu0 %v458
    %519 = vmatprep.subr.mxu0 %v461
    %520 = vmatpush1.msra.mxu0 %v460
    %521 = vmatprep.subr.mxu0 %v463
    %522 = vmatpush1.msra.mxu0 %v462
    %523 = vmatprep.subr.mxu0 %v465
    %524 = vmatpush1.msra.mxu0 %v464
    %525 = vmatprep.subr.mxu0 %v467
    %526 = vmatpush1.msra.mxu0 %v466
    %527 = vmatprep.subr.mxu0 %v469
    %528 = vmatpush1.msra.mxu0 %v468
    %529 = vmatprep.subr.mxu0 %v471
    %530 = vmatpush1.msra.mxu0 %v470
    %531 = vmatprep.subr.mxu0 %v473
    %532 = vmatpush1.msra.mxu0 %v472
    %533 = vmatprep.subr.mxu0 %v475
    %534 = vmatpush1.msra.mxu0 %v474
    %535 = vmatprep.subr.mxu0 0.0
    %536 = vmatpush1.msra.mxu0 0.0
    %537 = vmatprep.subr.mxu0 0.0
    %538 = vmatpush1.msra.mxu0 0.0
    %539 = vmatprep.subr.mxu0 0.0
    %540 = vmatpush1.msra.mxu0 0.0
    %541 = vmatprep.subr.mxu0 0.0
    %542 = vmatpush1.msra.mxu0 0.0
    %543 = vmatprep.subr.mxu0 0.0
    %544 = vmatpush1.msra.mxu0 0.0
    %545 = vmatprep.subr.mxu0 0.0
    %546 = vmatpush1.msra.mxu0 0.0
    %547 = vmatprep.subr.mxu0 0.0
    %548 = vmatpush1.msra.mxu0 0.0
    %549 = vmatprep.subr.mxu0 0.0
    %550 = vmatpush1.msra.mxu0 0.0
    %551 = vmatprep.subr.mxu0 0.0
    %552 = vmatpush1.msra.mxu0 0.0
    %553 = vmatprep.subr.mxu0 0.0
    %554 = vmatpush1.msra.mxu0 0.0
    %555 = vmatprep.subr.mxu0 0.0
    %556 = vmatpush1.msra.mxu0 0.0
    %557 = vmatprep.subr.mxu0 0.0
    %558 = vmatpush1.msra.mxu0 0.0
    %559 = vmatprep.mubr.f32.mxu0 %v490
    %560 = vmatmul.mubr.f32.gmra.mrb[0].mxu0 %v431
    %v561 = vpop.f32.mrb[0].mxu0
    %v562 = vadd.f32 %v482, %v561
    %v563 = vpop.f32.mrb[0].mxu0
    %v564 = vadd.f32 %v486, %v563
    %565 = vmatprep.mubr.f32.mxu0 %v493
    %566 = vmatmul.mubr.f32.gmra.mrb[0].mxu0 %v433
    %v567 = vpop.f32.mrb[0].mxu0
    %v568 = vadd.f32 %v482, %v567
    %v569 = vpop.f32.mrb[0].mxu0
    %v570 = vadd.f32 %v486, %v569
    %571 = vdwg.mxu0
    %v572 = vxor.u32 %v562, 2147483648
    %v573 = vxor.u32 %v564, 2147483648
    %v574 = vxor.u32 %v568, 2147483648
    %v575 = vxor.u32 %v570, 2147483648
    %v576 = vmul.f32 %v572, 1.442695
    %v577 = vpow.pop %v576
    %v578 = vmul.f32 %v573, 1.442695
    %v579 = vpow.pop %v578
    %v580 = vmul.f32 %v574, 1.442695
    %v581 = vpow.pop %v580
    %v582 = vmul.f32 %v575, 1.442695
    %v583 = vpow.pop %v582
    %v584 = vadd.f32 %v577, 1.0
    %v585 = vadd.f32 %v579, 1.0
    %v586 = vadd.f32 %v581, 1.0
    %v587 = vadd.f32 %v583, 1.0
    %v588 = vrcp.pop %v584
    %v589 = vmul.f32 1.0, %v588
    %v590 = vrcp.pop %v585
    %v591 = vmul.f32 1.0, %v590
    %v592 = vrcp.pop %v586
    %v593 = vmul.f32 1.0, %v592
    %v594 = vrcp.pop %v587
    %v595 = vmul.f32 1.0, %v594
    %v596 = vmul.f32 %v562, %v589
    %v597 = vmul.f32 %v564, %v591
    %v598 = vmul.f32 %v568, %v593
    %v599 = vmul.f32 %v570, %v595
    %v600 = vld [vmem:[%s6] sm:$0xff]
    %v601 = vld [vmem:[%s6 + $0x8] sm:$0xff]
    %v602 = vld [vmem:[%s6 + $0x10] sm:$0xff]
    %v603 = vld [vmem:[%s6 + $0x18] sm:$0xff]
    %v604 = vld [vmem:[%s6 + $0x20] sm:$0xff]
    %v605 = vld [vmem:[%s6 + $0x28] sm:$0xff]
    %v606 = vld [vmem:[%s6 + $0x30] sm:$0xff]
    %v607 = vld [vmem:[%s6 + $0x38] sm:$0xff]
    %v608 = vld [vmem:[%s6 + $0x40] sm:$0xff]
    %v609 = vld [vmem:[%s6 + $0x48] sm:$0xff]
    %v610 = vld [vmem:[%s6 + $0x50] sm:$0xff]
    %v611 = vld [vmem:[%s6 + $0x58] sm:$0xff]
    %v612 = vld [vmem:[%s6 + $0x60] sm:$0xff]
    %v613 = vld [vmem:[%s6 + $0x68] sm:$0xff]
    %v614 = vld [vmem:[%s6 + $0x70] sm:$0xff]
    %v615 = vld [vmem:[%s6 + $0x78] sm:$0xff]
    %v616 = vld [vmem:[%s6 + $0x80] sm:$0xff]
    %v617 = vld [vmem:[%s6 + $0x88] sm:$0xff]
    %v618 = vld [vmem:[%s6 + $0x90] sm:$0xff]
    %v619 = vld [vmem:[%s6 + $0x98] sm:$0xff]
    %v620 = vld [vmem:[%s7] sm:$0x1]
    %v622 = vlaneseq
    %v623 = vshrl.u32 %v622, 7
    %v624 = vsub.s32 0, %v623
    %v625 = vrot.slane %v620, %v624
    %v628 = vsel %vm323, %v597, 0
    %v631 = vsel %vm323, %v599, 0
    %633 = vmatprep.subr.mxu0 0.0
    %634 = vmatpush1.msra.mxu0 %v600
    %635 = vmatprep.subr.mxu0 0.0
    %636 = vmatpush1.msra.mxu0 %v601
    %637 = vmatprep.subr.mxu0 0.0
    %638 = vmatpush1.msra.mxu0 %v602
    %639 = vmatprep.subr.mxu0 0.0
    %640 = vmatpush1.msra.mxu0 %v603
    %641 = vmatprep.subr.mxu0 0.0
    %642 = vmatpush1.msra.mxu0 %v604
    %643 = vmatprep.subr.mxu0 0.0
    %644 = vmatpush1.msra.mxu0 %v605
    %645 = vmatprep.subr.mxu0 0.0
    %646 = vmatpush1.msra.mxu0 %v606
    %647 = vmatprep.subr.mxu0 0.0
    %648 = vmatpush1.msra.mxu0 %v607
    %649 = vmatprep.subr.mxu0 0.0
    %650 = vmatpush1.msra.mxu0 %v608
    %651 = vmatprep.subr.mxu0 0.0
    %652 = vmatpush1.msra.mxu0 %v609
    %653 = vmatprep.subr.mxu0 0.0
    %654 = vmatpush1.msra.mxu0 %v610
    %655 = vmatprep.subr.mxu0 0.0
    %656 = vmatpush1.msra.mxu0 %v611
    %657 = vmatprep.subr.mxu0 0.0
    %658 = vmatpush1.msra.mxu0 %v612
    %659 = vmatprep.subr.mxu0 0.0
    %660 = vmatpush1.msra.mxu0 %v613
    %661 = vmatprep.subr.mxu0 0.0
    %662 = vmatpush1.msra.mxu0 %v614
    %663 = vmatprep.subr.mxu0 0.0
    %664 = vmatpush1.msra.mxu0 %v615
    %665 = vmatprep.subr.mxu0 0.0
    %666 = vmatpush1.msra.mxu0 %v616
    %667 = vmatprep.subr.mxu0 0.0
    %668 = vmatpush1.msra.mxu0 %v617
    %669 = vmatprep.subr.mxu0 0.0
    %670 = vmatpush1.msra.mxu0 %v618
    %671 = vmatprep.subr.mxu0 0.0
    %672 = vmatpush1.msra.mxu0 %v619
    %673 = vmatprep.subr.mxu0 0.0
    %674 = vmatpush1.msra.mxu0 0.0
    %675 = vmatprep.subr.mxu0 0.0
    %676 = vmatpush1.msra.mxu0 0.0
    %677 = vmatprep.subr.mxu0 0.0
    %678 = vmatpush1.msra.mxu0 0.0
    %679 = vmatprep.subr.mxu0 0.0
    %680 = vmatpush1.msra.mxu0 0.0
    %681 = vmatprep.subr.mxu0 0.0
    %682 = vmatpush1.msra.mxu0 0.0
    %683 = vmatprep.subr.mxu0 0.0
    %684 = vmatpush1.msra.mxu0 0.0
    %685 = vmatprep.subr.mxu0 0.0
    %686 = vmatpush1.msra.mxu0 0.0
    %687 = vmatprep.subr.mxu0 0.0
    %688 = vmatpush1.msra.mxu0 0.0
    %689 = vmatprep.subr.mxu0 0.0
    %690 = vmatpush1.msra.mxu0 0.0
    %691 = vmatprep.subr.mxu0 0.0
    %692 = vmatpush1.msra.mxu0 0.0
    %693 = vmatprep.subr.mxu0 0.0
    %694 = vmatpush1.msra.mxu0 0.0
    %695 = vmatprep.subr.mxu0 0.0
    %696 = vmatpush1.msra.mxu0 0.0
    %697 = vmatprep.mubr.f32.mxu0 %v628
    %698 = vmatmul.mubr.f32.gmra.mrb[0].mxu0 %v596
    %v699 = vpop.f32.mrb[0].mxu0
    %v700 = vadd.f32 %v625, %v699
    %v701 = vpop.f32.mrb[0].mxu0
    %702 = vmatprep.mubr.f32.mxu0 %v631
    %703 = vmatmul.mubr.f32.gmra.mrb[0].mxu0 %v598
    %v704 = vpop.f32.mrb[0].mxu0
    %v705 = vadd.f32 %v625, %v704
    %v706 = vpop.f32.mrb[0].mxu0
    %707 = vdwg.mxu0
    %v708 = vld [vmem:[%s8] sm:$0xff]
    %v709 = vld [vmem:[%s8 + $0x8] sm:$0xff]
    %v710 = vld [vmem:[%s8 + $0x10] sm:$0xf]
    %v712 = vsel %vm51, %v700, 0
    %v715 = vsel %vm51, %v705, 0
    %v718 = vsel %vm58, %v710, 0
    %720 = vmatprep.subr.mxu0 0.0
    %721 = vmatpush1.msra.mxu0 %v708
    %722 = vmatprep.subr.mxu0 0.0
    %723 = vmatpush1.msra.mxu0 %v709
    %724 = vmatprep.subr.mxu0 0.0
    %725 = vmatpush1.msra.mxu0 %v718
    %726 = vmatprep.subr.mxu0 0.0
    %727 = vmatpush1.msra.mxu0 0.0
    %728 = vmatprep.subr.mxu0 0.0
    %729 = vmatpush1.msra.mxu0 0.0
    %730 = vmatprep.subr.mxu0 0.0
    %731 = vmatpush1.msra.mxu0 0.0
    %732 = vmatprep.subr.mxu0 0.0
    %733 = vmatpush1.msra.mxu0 0.0
    %734 = vmatprep.subr.mxu0 0.0
    %735 = vmatpush1.msra.mxu0 0.0
    %736 = vmatprep.subr.mxu0 0.0
    %737 = vmatpush1.msra.mxu0 0.0
    %738 = vmatprep.subr.mxu0 0.0
    %739 = vmatpush1.msra.mxu0 0.0
    %740 = vmatprep.subr.mxu0 0.0
    %741 = vmatpush1.msra.mxu0 0.0
    %742 = vmatprep.subr.mxu0 0.0
    %743 = vmatpush1.msra.mxu0 0.0
    %744 = vmatprep.subr.mxu0 0.0
    %745 = vmatpush1.msra.mxu0 0.0
    %746 = vmatprep.subr.mxu0 0.0
    %747 = vmatpush1.msra.mxu0 0.0
    %748 = vmatprep.subr.mxu0 0.0
    %749 = vmatpush1.msra.mxu0 0.0
    %750 = vmatprep.subr.mxu0 0.0
    %751 = vmatpush1.msra.mxu0 0.0
    %752 = vmatprep.subr.mxu0 0.0
    %753 = vmatpush1.msra.mxu0 0.0
    %754 = vmatprep.subr.mxu0 0.0
    %755 = vmatpush1.msra.mxu0 0.0
    %756 = vmatprep.subr.mxu0 0.0
    %757 = vmatpush1.msra.mxu0 0.0
    %758 = vmatprep.subr.mxu0 0.0
    %759 = vmatpush1.msra.mxu0 0.0
    %760 = vmatprep.subr.mxu0 0.0
    %761 = vmatpush1.msra.mxu0 0.0
    %762 = vmatprep.subr.mxu0 0.0
    %763 = vmatpush1.msra.mxu0 0.0
    %764 = vmatprep.subr.mxu0 0.0
    %765 = vmatpush1.msra.mxu0 0.0
    %766 = vmatprep.subr.mxu0 0.0
    %767 = vmatpush1.msra.mxu0 0.0
    %768 = vmatprep.subr.mxu0 0.0
    %769 = vmatpush1.msra.mxu0 0.0
    %770 = vmatprep.subr.mxu0 0.0
    %771 = vmatpush1.msra.mxu0 0.0
    %772 = vmatprep.subr.mxu0 0.0
    %773 = vmatpush1.msra.mxu0 0.0
    %774 = vmatprep.subr.mxu0 0.0
    %775 = vmatpush1.msra.mxu0 0.0
    %776 = vmatprep.subr.mxu0 0.0
    %777 = vmatpush1.msra.mxu0 0.0
    %778 = vmatprep.subr.mxu0 0.0
    %779 = vmatpush1.msra.mxu0 0.0
    %780 = vmatprep.subr.mxu0 0.0
    %781 = vmatpush1.msra.mxu0 0.0
    %782 = vmatprep.subr.mxu0 0.0
    %783 = vmatpush1.msra.mxu0 0.0
    %784 = vmatprep.mubr.f32.mxu0 0.0
    %785 = vmatmul.mubr.f32.gmra.mrb[0].mxu0 %v712
    %v786 = vpop.f32.mrb[0].mxu0
    %v787 = vadd.f32 0.0, %v786
    %v788 = vpop.f32.mrb[0].mxu0
    %789 = vmatprep.mubr.f32.mxu0 0.0
    %790 = vmatmul.mubr.f32.gmra.mrb[0].mxu0 %v715
    %v791 = vpop.f32.mrb[0].mxu0
    %v792 = vadd.f32 0.0, %v791
    %v793 = vpop.f32.mrb[0].mxu0
    %794 = vdwg.mxu0
    %795 = vst.msk [vmem:[%s9] sm:$0xff] %vm51, %v787
    %796 = vst.msk [vmem:[%s9 + $0x8] sm:$0xff] %vm51, %v792
    // Predicated region
    $region42: #{rel_mot_forward.1} parent=1 // pred_check
      _
    $region43: #{rel_mot_forward.1} parent=1 // pred_check_branch
      %798 = sbr.rel (0) target = $region45
    $region44: #{rel_mot_forward.1} parent=1 // pred_region
      _
    $region45: #{rel_mot_forward.1} parent=1 // pred_fallthru
      _
    // Predicated region
    $region46: #{rel_mot_forward.1} parent=1 // pred_check
      _
    $region47: #{rel_mot_forward.1} parent=1 // pred_check_branch
      %800 = sbr.rel (0) target = $region49
    $region48: #{rel_mot_forward.1} parent=1 // pred_region
      _
    $region49: #{rel_mot_forward.1} parent=1 // pred_fallthru
      _
    %801 = vsyncpa [#allocation3], 1

</llo_original>
